<compile_context>
chip_gen: v7x
topology: tpu7x:2x2x1
jax: 0.10.0
libtpu: 0.0.40
codegen_flags: <defaults>
</compile_context>

<pallas_src>
import functools

import jax
import jax.numpy as jnp
import numpy as np
from jax.experimental import pallas as pl
from jax.experimental.pallas import tpu as pltpu

_LANE = 128
_VMEM_LIMIT = 32 * 1024 * 1024  # safe on v5e / v6e / v7x


def _round_up(n, m):
    return ((n + m - 1) // m) * m


def _pad2(a, rows, cols):
    return jnp.pad(a, ((0, rows - a.shape[0]), (0, cols - a.shape[1])))


# ---------------------------------------------------------------------------
# Fused kernel: whole 2-layer GCN forward, everything VMEM-resident.
#   adj : (Np, Np) bf16   adj[dst, src] = 1.0 for edge src -> dst (0/1 exact)
#   x   : (Np, Fp) bf16   node features (one-hot -> exact in bf16)
#   w1t : (Fp, Hp) bf16   W1 transposed      b1 : (1, Hp) f32
#   w2t : (Hp, Cp) bf16   W2 transposed      b2 : (1, Cp) f32
#   o   : (Np, Cp) f32    logits
# All matmuls take bf16 operands on the MXU and accumulate in f32.
# ---------------------------------------------------------------------------
def _fused_gcn_kernel(adj_ref, x_ref, w1_ref, b1_ref, w2_ref, b2_ref, o_ref):
    adj = adj_ref[...]

    # layer 1:  h1 = relu(A @ (x @ W1^T) + b1)        (right-associated)
    z1 = jnp.dot(x_ref[...], w1_ref[...], preferred_element_type=jnp.float32)
    h1 = jnp.dot(adj, z1.astype(jnp.bfloat16), preferred_element_type=jnp.float32)
    h1 = jnp.maximum(h1 + b1_ref[...], 0.0)

    # layer 2:  out = A @ (h1 @ W2^T) + b2
    z2 = jnp.dot(h1.astype(jnp.bfloat16), w2_ref[...],
                 preferred_element_type=jnp.float32)
    out = jnp.dot(adj, z2.astype(jnp.bfloat16),
                  preferred_element_type=jnp.float32) + b2_ref[...]

    o_ref[...] = out.astype(o_ref.dtype)


# ---------------------------------------------------------------------------
# One-time glue (model/graph init): pad lane-dense, transpose weights, cast to
# bf16.  Hoisted out of the jitted forward so repeated calls don't pay for it.
# ---------------------------------------------------------------------------
def prepare_gcn(adj, x, w1, b1, w2, b2):
    n, f = x.shape
    h = w1.shape[0]
    c = w2.shape[0]
    n_p, f_p = _round_up(n, _LANE), _round_up(f, _LANE)
    h_p, c_p = _round_up(h, _LANE), _round_up(c, _LANE)

    adj_p = _pad2(adj.astype(jnp.float32), n_p, n_p).astype(jnp.bfloat16)  # 0/1 exact
    x_p = _pad2(x.astype(jnp.float32), n_p, f_p).astype(jnp.bfloat16)      # one-hot exact
    w1t = _pad2(jnp.transpose(w1).astype(jnp.float32), f_p, h_p).astype(jnp.bfloat16)
    w2t = _pad2(jnp.transpose(w2).astype(jnp.float32), h_p, c_p).astype(jnp.bfloat16)
    b1_p = _pad2(b1.reshape(1, -1).astype(jnp.float32), 1, h_p)
    b2_p = _pad2(b2.reshape(1, -1).astype(jnp.float32), 1, c_p)
    return (adj_p, x_p, w1t, b1_p, w2t, b2_p), (n, c)


# ---------------------------------------------------------------------------
# Forward pass matching simple_GCN.forward(graph, inputs).
# Takes the pre-padded / pre-cast tensors from prepare_gcn.
# ---------------------------------------------------------------------------
@functools.partial(jax.jit, static_argnames=("n", "c"))
def simple_gcn_forward(adj_p, x_p, w1t, b1_p, w2t, b2_p, *, n, c):
    n_p, f_p = x_p.shape
    h_p = w1t.shape[1]
    c_p = w2t.shape[1]

    flops = 2 * (n_p * f_p * h_p + n_p * n_p * h_p + n_p * h_p * c_p + n_p * n_p * c_p)
    bytes_accessed = (
        sum(a.size * a.dtype.itemsize for a in (adj_p, x_p, w1t, b1_p, w2t, b2_p))
        + n_p * c_p * 4
    )

    vmem = pl.BlockSpec(memory_space=pltpu.MemorySpace.VMEM)
    out_p = pl.pallas_call(
        _fused_gcn_kernel,
        out_shape=jax.ShapeDtypeStruct((n_p, c_p), jnp.float32),
        in_specs=[vmem, vmem, vmem, vmem, vmem, vmem],
        out_specs=vmem,
        compiler_params=pltpu.CompilerParams(vmem_limit_bytes=_VMEM_LIMIT),
        cost_estimate=pl.CostEstimate(
            flops=flops, transcendentals=0, bytes_accessed=bytes_accessed
        ),
    )(adj_p, x_p, w1t, b1_p, w2t, b2_p)

    return out_p[:n, :c]


# ---------------------------------------------------------------------------
# Deterministic synthetic graph + parameters (Zachary-karate-club scale)
# ---------------------------------------------------------------------------
def _build_graph_and_params():
    N = 34            # karate-club node count
    F_IN = 34         # one-hot node features, as in the DGL tutorial
    HIDDEN = 16
    NUM_CLASSES = 2

    key = jax.random.PRNGKey(0)
    k_adj, k_w1, k_b1, k_w2, k_b2 = jax.random.split(key, 5)

    # Random sparse directed adjacency; add a ring so no mailbox is empty.
    rnd = jax.random.uniform(k_adj, (N, N))
    adj = (rnd < 0.12).astype(jnp.float32)
    adj = adj * (1.0 - jnp.eye(N, dtype=jnp.float32))                 # no self-loops
    ring = jnp.roll(jnp.eye(N, dtype=jnp.float32), shift=1, axis=1)   # i <- i+1 edge
    adj = jnp.clip(adj + ring, 0.0, 1.0)                              # A[dst, src]

    x = jnp.eye(N, F_IN, dtype=jnp.float32)

    def lin_init(kw, kb, fan_in, fan_out):
        bound = 1.0 / float(np.sqrt(fan_in))
        w = jax.random.uniform(kw, (fan_out, fan_in), jnp.float32, -bound, bound)
        b = jax.random.uniform(kb, (fan_out,), jnp.float32, -bound, bound)
        return w, b

    w1, b1 = lin_init(k_w1, k_b1, F_IN, HIDDEN)
    w2, b2 = lin_init(k_w2, k_b2, HIDDEN, NUM_CLASSES)
    return adj, x, w1, b1, w2, b2


if __name__ == "__main__":
    adj, x, w1, b1, w2, b2 = _build_graph_and_params()

    # One-time prep (model init), then the jitted fused-kernel forward.
    prepared, (n, c) = prepare_gcn(adj, x, w1, b1, w2, b2)
    out = simple_gcn_forward(*prepared, n=n, c=c)
    out = jax.block_until_ready(out)
    assert out.shape == (n, c)

    # Reference 1: same math with the kernel's exact bf16 operand / f32
    # accumulate dtype path (tight check of kernel correctness).
    adj_b = adj.astype(jnp.bfloat16)
    x_b = x.astype(jnp.bfloat16)
    w1t_b = jnp.transpose(w1).astype(jnp.bfloat16)
    w2t_b = jnp.transpose(w2).astype(jnp.bfloat16)
    z1_r = jnp.dot(x_b, w1t_b, preferred_element_type=jnp.float32)
    h1_r = jnp.maximum(
        jnp.dot(adj_b, z1_r.astype(jnp.bfloat16), preferred_element_type=jnp.float32)
        + b1, 0.0)
    z2_r = jnp.dot(h1_r.astype(jnp.bfloat16), w2t_b, preferred_element_type=jnp.float32)
    ref_q = (jnp.dot(adj_b, z2_r.astype(jnp.bfloat16),
                     preferred_element_type=jnp.float32) + b2)
    assert jnp.allclose(out, ref_q, atol=1e-2, rtol=1e-2)

    # Reference 2: pure-f32 module semantics (loose check; the only deviation
    # is the bf16 MXU operand path with f32 accumulation).
    h1_f = jnp.maximum(adj @ x @ w1.T + b1, 0.0)
    ref_f = adj @ h1_f @ w2.T + b2
    assert jnp.allclose(out, ref_f, atol=5e-2, rtol=5e-2)

    print("KERNEL_OK")
</pallas_src>

<mosaic_0001>
module attributes {stable_mosaic.version = 11 : i64} {
  func.func @_fused_gcn_kernel(%arg0: memref<128x128xbf16, #tpu.memory_space<vmem>>, %arg1: memref<128x128xbf16, #tpu.memory_space<vmem>>, %arg2: memref<128x128xbf16, #tpu.memory_space<vmem>>, %arg3: memref<1x128xf32, #tpu.memory_space<vmem>>, %arg4: memref<128x128xbf16, #tpu.memory_space<vmem>>, %arg5: memref<1x128xf32, #tpu.memory_space<vmem>>, %arg6: memref<128x128xf32, #tpu.memory_space<vmem>>) attributes {dimension_semantics = [], scalar_prefetch = 0 : i64, scratch_operands = 0 : i64, tpu.core_type = #tpu.core_type<tc>} {
    %c0 = arith.constant 0 : index
    %c0_0 = arith.constant 0 : index
    %0 = vector.load %arg0[%c0, %c0_0] : memref<128x128xbf16, #tpu.memory_space<vmem>>, vector<128x128xbf16>
    %c0_1 = arith.constant 0 : index
    %c0_2 = arith.constant 0 : index
    %1 = vector.load %arg1[%c0_1, %c0_2] : memref<128x128xbf16, #tpu.memory_space<vmem>>, vector<128x128xbf16>
    %c0_3 = arith.constant 0 : index
    %c0_4 = arith.constant 0 : index
    %2 = vector.load %arg2[%c0_3, %c0_4] : memref<128x128xbf16, #tpu.memory_space<vmem>>, vector<128x128xbf16>
    %cst = arith.constant dense<0.000000e+00> : vector<128x128xf32>
    %3 = tpu.matmul %1, %2, %cst {dimension_numbers = #tpu.dot_dimension_numbers<[1], [0], [0], [1], [0, 0, 1, 1], [], []>} : vector<128x128xbf16>, vector<128x128xbf16>, vector<128x128xf32> -> vector<128x128xf32>
    %4 = arith.truncf %3 : vector<128x128xf32> to vector<128x128xbf16>
    %cst_5 = arith.constant dense<0.000000e+00> : vector<128x128xf32>
    %5 = tpu.matmul %0, %4, %cst_5 {dimension_numbers = #tpu.dot_dimension_numbers<[1], [0], [0], [1], [0, 0, 1, 1], [], []>} : vector<128x128xbf16>, vector<128x128xbf16>, vector<128x128xf32> -> vector<128x128xf32>
    %c0_6 = arith.constant 0 : index
    %c0_7 = arith.constant 0 : index
    %6 = vector.load %arg3[%c0_6, %c0_7] : memref<1x128xf32, #tpu.memory_space<vmem>>, vector<1x128xf32>
    %7 = vector.broadcast %6 : vector<1x128xf32> to vector<128x128xf32>
    %8 = arith.addf %5, %7 : vector<128x128xf32>
    %cst_8 = arith.constant 0.000000e+00 : f32
    %9 = vector.broadcast %cst_8 : f32 to vector<128x128xf32>
    %10 = arith.maximumf %8, %9 : vector<128x128xf32>
    %11 = arith.truncf %10 : vector<128x128xf32> to vector<128x128xbf16>
    %c0_9 = arith.constant 0 : index
    %c0_10 = arith.constant 0 : index
    %12 = vector.load %arg4[%c0_9, %c0_10] : memref<128x128xbf16, #tpu.memory_space<vmem>>, vector<128x128xbf16>
    %cst_11 = arith.constant dense<0.000000e+00> : vector<128x128xf32>
    %13 = tpu.matmul %11, %12, %cst_11 {dimension_numbers = #tpu.dot_dimension_numbers<[1], [0], [0], [1], [0, 0, 1, 1], [], []>} : vector<128x128xbf16>, vector<128x128xbf16>, vector<128x128xf32> -> vector<128x128xf32>
    %14 = arith.truncf %13 : vector<128x128xf32> to vector<128x128xbf16>
    %cst_12 = arith.constant dense<0.000000e+00> : vector<128x128xf32>
    %15 = tpu.matmul %0, %14, %cst_12 {dimension_numbers = #tpu.dot_dimension_numbers<[1], [0], [0], [1], [0, 0, 1, 1], [], []>} : vector<128x128xbf16>, vector<128x128xbf16>, vector<128x128xf32> -> vector<128x128xf32>
    %c0_13 = arith.constant 0 : index
    %c0_14 = arith.constant 0 : index
    %16 = vector.load %arg5[%c0_13, %c0_14] : memref<1x128xf32, #tpu.memory_space<vmem>>, vector<1x128xf32>
    %17 = vector.broadcast %16 : vector<1x128xf32> to vector<128x128xf32>
    %18 = arith.addf %15, %17 : vector<128x128xf32>
    %c0_15 = arith.constant 0 : index
    %c0_16 = arith.constant 0 : index
    %19 = vector.load %arg6[%c0_15, %c0_16] : memref<128x128xf32, #tpu.memory_space<vmem>>, vector<128x128xf32>
    tpu.vector_store %arg6[%c0_15, %c0_16], %18 {strides = array<i32>} : memref<128x128xf32, #tpu.memory_space<vmem>>, vector<128x128xf32>,
    return
  }
}

</mosaic_0001>

<llo_original>
// kernel: simple_gcn_forward.1
$region0: #{simple_gcn_forward.1}
  #allocation0 [shape = 'u32[]', space=smem, size = 0x4, offset = 0x4, fixed_abs, tag = 'smem constant byte address 0x4 - core index']
  #allocation1 [shape = 'u32[144,128]{1,0:T(1,128)}', space=vmem, size = 0x12000, scoped, tag = 'internal scratch']
  %s0 = inlined_call_operand.hbm [shape: bf16[128,128], index: 0, kind: input, shape index: {}]
  %s1 = inlined_call_operand.hbm [shape: bf16[128,128], index: 1, kind: input, shape index: {}]
  %s2 = inlined_call_operand.hbm [shape: bf16[128,128], index: 2, kind: input, shape index: {}]
  %s3 = inlined_call_operand.vmem [shape: f32[1,128], index: 3, kind: input, shape index: {}]
  %s4 = inlined_call_operand.hbm [shape: bf16[128,128], index: 4, kind: input, shape index: {}]
  %s5 = inlined_call_operand.vmem [shape: f32[1,128], index: 5, kind: input, shape index: {}]
  %s6 = inlined_call_operand.vmem [shape: f32[128,128], index: 6, kind: output, shape index: {}]
  %s7 = sld [smem:[#allocation0]]
  $region50: #{simple_gcn_forward.1} parent=0
    _
  %s9 = ssub.s32 1, %s7
  %s10 = scalar_select 0, %s9, %s7
  $region1: #{simple_gcn_forward.1} parent=0
    #allocation2 [shape = 'u8[32768]{0}', space=vmem, size = 0x8000, scoped, tag = 'input window, operand 0, single buffered']
    #allocation3 [shape = 's32[1]{0}', space=sflag, size = 0x4, scoped, tag = 'scoped memory for simple_gcn_forward.1']
    #allocation4 [shape = 'u8[32768]{0}', space=vmem, size = 0x8000, scoped, tag = 'input window, operand 1, single buffered']
    #allocation5 [shape = 's32[1]{0}', space=sflag, size = 0x4, scoped, tag = 'scoped memory for simple_gcn_forward.1']
    #allocation6 [shape = 'u8[32768]{0}', space=vmem, size = 0x8000, scoped, tag = 'input window, operand 2, single buffered']
    #allocation7 [shape = 'u8[32768]{0}', space=vmem, size = 0x8000, scoped, tag = 'input window, operand 4, single buffered']
    #allocation8 [shape = 's32[1]{0}', space=sflag, size = 0x4, scoped, tag = 'scoped memory for simple_gcn_forward.1']
    %11 = vsyncpa [#allocation3], 0
    %12 = vsyncpa [#allocation5], 0
    %13 = vsyncpa [#allocation8], 0
    // Predicated region
    $region2: #{simple_gcn_forward.1} parent=1 // pred_check
      _
    $region3: #{simple_gcn_forward.1} parent=1 // pred_check_branch
      %15 = sbr.rel (0) target = $region5
    $region4: #{simple_gcn_forward.1} parent=1 // pred_region
      %s17 = ssub.s32 1024, 1024
      %18 = vsyncadd [#allocation3], %s17
      %s19 = sshll.u32 [#allocation2], 4
      %s20 = int_to_ptr.vmem [resolvable:$true] %s19
      %25 = dma.hbm_to_vmem [thread:$0]  %s0, 1024, %s20, [#allocation3], 64, 64, 4
    $region5: #{simple_gcn_forward.1} parent=1 // pred_fallthru
      _
    // Predicated region
    $region6: #{simple_gcn_forward.1} parent=1 // pred_check
      _
    $region7: #{simple_gcn_forward.1} parent=1 // pred_check_branch
      %27 = sbr.rel (0) target = $region9
    $region8: #{simple_gcn_forward.1} parent=1 // pred_region
      %s29 = ssub.s32 1024, 1024
      %30 = vsyncadd [#allocation5], %s29
      %s31 = sshll.u32 [#allocation4], 4
      %s32 = int_to_ptr.vmem [resolvable:$true] %s31
      %37 = dma.hbm_to_vmem [thread:$0]  %s1, 1024, %s32, [#allocation5], 64, 64, 4
    $region9: #{simple_gcn_forward.1} parent=1 // pred_fallthru
      _
    // Predicated region
    $region10: #{simple_gcn_forward.1} parent=1 // pred_check
      _
    $region11: #{simple_gcn_forward.1} parent=1 // pred_check_branch
      %39 = sbr.rel (0) target = $region13
    $region12: #{simple_gcn_forward.1} parent=1 // pred_region
      %s41 = ssub.s32 1024, 1024
      %42 = vsyncadd [#allocation5], %s41
      %s43 = sshll.u32 [#allocation6], 4
      %s44 = int_to_ptr.vmem [resolvable:$true] %s43
      %49 = dma.hbm_to_vmem [thread:$0]  %s2, 1024, %s44, [#allocation5], 64, 64, 4
    $region13: #{simple_gcn_forward.1} parent=1 // pred_fallthru
      _
    // Predicated region
    $region14: #{simple_gcn_forward.1} parent=1 // pred_check
      _
    $region15: #{simple_gcn_forward.1} parent=1 // pred_check_branch
      %51 = sbr.rel (0) target = $region17
    $region16: #{simple_gcn_forward.1} parent=1 // pred_region
      _
    $region17: #{simple_gcn_forward.1} parent=1 // pred_fallthru
      _
    // Predicated region
    $region18: #{simple_gcn_forward.1} parent=1 // pred_check
      _
    $region19: #{simple_gcn_forward.1} parent=1 // pred_check_branch
      %53 = sbr.rel (0) target = $region21
    $region20: #{simple_gcn_forward.1} parent=1 // pred_region
      %s55 = ssub.s32 1024, 1024
      %56 = vsyncadd [#allocation8], %s55
      %s57 = sshll.u32 [#allocation7], 4
      %s58 = int_to_ptr.vmem [resolvable:$true] %s57
      %63 = dma.hbm_to_vmem [thread:$0]  %s4, 1024, %s58, [#allocation8], 64, 64, 4
    $region21: #{simple_gcn_forward.1} parent=1 // pred_fallthru
      _
    // Predicated region
    $region22: #{simple_gcn_forward.1} parent=1 // pred_check
      _
    $region23: #{simple_gcn_forward.1} parent=1 // pred_check_branch
      %65 = sbr.rel (0) target = $region25
    $region24: #{simple_gcn_forward.1} parent=1 // pred_region
      _
    $region25: #{simple_gcn_forward.1} parent=1 // pred_fallthru
      _
    // Predicated region
    $region26: #{simple_gcn_forward.1} parent=1 // pred_check
      _
    $region27: #{simple_gcn_forward.1} parent=1 // pred_check_branch
      %67 = sbr.rel (0) target = $region29
    $region28: #{simple_gcn_forward.1} parent=1 // pred_region
      %68 = dma.done [#allocation3], 1024
    $region29: #{simple_gcn_forward.1} parent=1 // pred_fallthru
      _
    // Predicated region
    $region30: #{simple_gcn_forward.1} parent=1 // pred_check
      _
    $region31: #{simple_gcn_forward.1} parent=1 // pred_check_branch
      %70 = sbr.rel (0) target = $region33
    $region32: #{simple_gcn_forward.1} parent=1 // pred_region
      %71 = dma.done [#allocation5], 1024
    $region33: #{simple_gcn_forward.1} parent=1 // pred_fallthru
      _
    // Predicated region
    $region34: #{simple_gcn_forward.1} parent=1 // pred_check
      _
    $region35: #{simple_gcn_forward.1} parent=1 // pred_check_branch
      %73 = sbr.rel (0) target = $region37
    $region36: #{simple_gcn_forward.1} parent=1 // pred_region
      %74 = dma.done [#allocation5], 1024
    $region37: #{simple_gcn_forward.1} parent=1 // pred_fallthru
      _
    // Predicated region
    $region38: #{simple_gcn_forward.1} parent=1 // pred_check
      _
    $region39: #{simple_gcn_forward.1} parent=1 // pred_check_branch
      %76 = sbr.rel (0) target = $region41
    $region40: #{simple_gcn_forward.1} parent=1 // pred_region
      %77 = dma.done [#allocation8], 1024
    $region41: #{simple_gcn_forward.1} parent=1 // pred_fallthru
      _
    %v79 = vld [vmem:[#allocation2] sm:$0xf]
    %v80 = vld [vmem:[#allocation2 + $0x4] sm:$0xf]
    %v81 = vld [vmem:[#allocation2 + $0x8] sm:$0xf]
    %v82 = vld [vmem:[#allocation2 + $0xc] sm:$0xf]
    %v83 = vld [vmem:[#allocation2 + $0x10] sm:$0xf]
    %v84 = vld [vmem:[#allocation2 + $0x14] sm:$0xf]
    %v85 = vld [vmem:[#allocation2 + $0x18] sm:$0xf]
    %v86 = vld [vmem:[#allocation2 + $0x1c] sm:$0xf]
    %v87 = vld [vmem:[#allocation2 + $0x20] sm:$0xf]
    %v88 = vld [vmem:[#allocation2 + $0x24] sm:$0xf]
    %v89 = vld [vmem:[#allocation2 + $0x28] sm:$0xf]
    %v90 = vld [vmem:[#allocation2 + $0x2c] sm:$0xf]
    %v91 = vld [vmem:[#allocation2 + $0x30] sm:$0xf]
    %v92 = vld [vmem:[#allocation2 + $0x34] sm:$0xf]
    %v93 = vld [vmem:[#allocation2 + $0x38] sm:$0xf]
    %v94 = vld [vmem:[#allocation2 + $0x3c] sm:$0xf]
    %v95 = vld [vmem:[#allocation4] sm:$0xf]
    %v96 = vld [vmem:[#allocation4 + $0x4] sm:$0xf]
    %v97 = vld [vmem:[#allocation4 + $0x8] sm:$0xf]
    %v98 = vld [vmem:[#allocation4 + $0xc] sm:$0xf]
    %v99 = vld [vmem:[#allocation4 + $0x10] sm:$0xf]
    %v100 = vld [vmem:[#allocation4 + $0x14] sm:$0xf]
    %v101 = vld [vmem:[#allocation4 + $0x18] sm:$0xf]
    %v102 = vld [vmem:[#allocation4 + $0x1c] sm:$0xf]
    %v103 = vld [vmem:[#allocation4 + $0x20] sm:$0xf]
    %v104 = vld [vmem:[#allocation4 + $0x24] sm:$0xf]
    %v105 = vld [vmem:[#allocation4 + $0x28] sm:$0xf]
    %v106 = vld [vmem:[#allocation4 + $0x2c] sm:$0xf]
    %v107 = vld [vmem:[#allocation4 + $0x30] sm:$0xf]
    %v108 = vld [vmem:[#allocation4 + $0x34] sm:$0xf]
    %v109 = vld [vmem:[#allocation4 + $0x38] sm:$0xf]
    %v110 = vld [vmem:[#allocation4 + $0x3c] sm:$0xf]
    %v111 = vld [vmem:[#allocation6] sm:$0xf]
    %v112 = vld [vmem:[#allocation6 + $0x4] sm:$0xf]
    %v113 = vld [vmem:[#allocation6 + $0x8] sm:$0xf]
    %v114 = vld [vmem:[#allocation6 + $0xc] sm:$0xf]
    %v115 = vld [vmem:[#allocation6 + $0x10] sm:$0xf]
    %v116 = vld [vmem:[#allocation6 + $0x14] sm:$0xf]
    %v117 = vld [vmem:[#allocation6 + $0x18] sm:$0xf]
    %v118 = vld [vmem:[#allocation6 + $0x1c] sm:$0xf]
    %v119 = vld [vmem:[#allocation6 + $0x20] sm:$0xf]
    %v120 = vld [vmem:[#allocation6 + $0x24] sm:$0xf]
    %v121 = vld [vmem:[#allocation6 + $0x28] sm:$0xf]
    %v122 = vld [vmem:[#allocation6 + $0x2c] sm:$0xf]
    %v123 = vld [vmem:[#allocation6 + $0x30] sm:$0xf]
    %v124 = vld [vmem:[#allocation6 + $0x34] sm:$0xf]
    %v125 = vld [vmem:[#allocation6 + $0x38] sm:$0xf]
    %v126 = vld [vmem:[#allocation6 + $0x3c] sm:$0xf]
    %v143 = vunpack.c.l.b16 %v95
    %v144 = vunpack.c.l.b16 %v96
    %v145 = vunpack.c.l.b16 %v97
    %v146 = vunpack.c.l.b16 %v98
    %v147 = vunpack.c.l.b16 %v99
    %v148 = vunpack.c.l.b16 %v100
    %v149 = vunpack.c.l.b16 %v101
    %v150 = vunpack.c.l.b16 %v102
    %v151 = vunpack.c.l.b16 %v103
    %v152 = vunpack.c.l.b16 %v104
    %v153 = vunpack.c.l.b16 %v105
    %v154 = vunpack.c.l.b16 %v106
    %v155 = vunpack.c.l.b16 %v107
    %v156 = vunpack.c.l.b16 %v108
    %v157 = vunpack.c.l.b16 %v109
    %v158 = vunpack.c.l.b16 %v110
    %v159 = vpack.c.b16 %v144, %v143
    %v160 = vpack.c.b16 %v146, %v145
    %v161 = vpack.c.b16 %v148, %v147
    %v162 = vpack.c.b16 %v150, %v149
    %v163 = vpack.c.b16 %v152, %v151
    %v164 = vpack.c.b16 %v154, %v153
    %v165 = vpack.c.b16 %v156, %v155
    %v166 = vpack.c.b16 %v158, %v157
    %v191 = vunpack.c.l.b16 %v111
    %v192 = vunpack.c.l.b16 %v112
    %v193 = vunpack.c.l.b16 %v113
    %v194 = vunpack.c.l.b16 %v114
    %v195 = vunpack.c.l.b16 %v115
    %v196 = vunpack.c.l.b16 %v116
    %v197 = vunpack.c.l.b16 %v117
    %v198 = vunpack.c.l.b16 %v118
    %v199 = vunpack.c.l.b16 %v119
    %v200 = vunpack.c.l.b16 %v120
    %v201 = vunpack.c.l.b16 %v121
    %v202 = vunpack.c.l.b16 %v122
    %v203 = vunpack.c.l.b16 %v123
    %v204 = vunpack.c.l.b16 %v124
    %v205 = vunpack.c.l.b16 %v125
    %v206 = vunpack.c.l.b16 %v126
    %v207 = vpack.c.b16 %v192, %v191
    %v208 = vpack.c.b16 %v194, %v193
    %v209 = vpack.c.b16 %v196, %v195
    %v210 = vpack.c.b16 %v198, %v197
    %v211 = vpack.c.b16 %v200, %v199
    %v212 = vpack.c.b16 %v202, %v201
    %v213 = vpack.c.b16 %v204, %v203
    %v214 = vpack.c.b16 %v206, %v205
    %223 = vmatprep.subr.bf16.mxu0 0
    %224 = vmatpush1.bf16.msra.mxu0 %v207
    %225 = vmatprep.subr.bf16.mxu0 0
    %226 = vmatpush1.bf16.msra.mxu0 %v208
    %227 = vmatprep.subr.bf16.mxu0 0
    %228 = vmatpush1.bf16.msra.mxu0 %v209
    %229 = vmatprep.subr.bf16.mxu0 0
    %230 = vmatpush1.bf16.msra.mxu0 %v210
    %231 = vmatprep.subr.bf16.mxu0 0
    %232 = vmatpush1.bf16.msra.mxu0 %v211
    %233 = vmatprep.subr.bf16.mxu0 0
    %234 = vmatpush1.bf16.msra.mxu0 %v212
    %235 = vmatprep.subr.bf16.mxu0 0
    %236 = vmatpush1.bf16.msra.mxu0 %v213
    %237 = vmatprep.subr.bf16.mxu0 0
    %238 = vmatpush1.bf16.msra.mxu0 %v214
    %239 = vmatprep.subr.bf16.mxu0 0
    %240 = vmatpush1.bf16.msra.mxu0 0
    %241 = vmatprep.subr.bf16.mxu0 0
    %242 = vmatpush1.bf16.msra.mxu0 0
    %243 = vmatprep.subr.bf16.mxu0 0
    %244 = vmatpush1.bf16.msra.mxu0 0
    %245 = vmatprep.subr.bf16.mxu0 0
    %246 = vmatpush1.bf16.msra.mxu0 0
    %247 = vmatprep.subr.bf16.mxu0 0
    %248 = vmatpush1.bf16.msra.mxu0 0
    %249 = vmatprep.subr.bf16.mxu0 0
    %250 = vmatpush1.bf16.msra.mxu0 0
    %251 = vmatprep.subr.bf16.mxu0 0
    %252 = vmatpush1.bf16.msra.mxu0 0
    %253 = vmatprep.subr.bf16.mxu0 0
    %254 = vmatpush1.bf16.msra.mxu0 0
    %255 = vmatprep.mubr.bf16.mxu0 0
    %256 = vmatmul.mubr.bf16.gmra.mrb[0].mxu0 %v159
    %v257 = vpop.f32.mrb[0].mxu0
    %v258 = vadd.f32 0.0, %v257
    %v259 = vpop.f32.mrb[0].mxu0
    %v260 = vpop.f32.mrb[0].mxu0
    %v261 = vadd.f32 0.0, %v260
    %v262 = vpop.f32.mrb[0].mxu0
    %263 = vmatprep.mubr.bf16.mxu0 0
    %264 = vmatmul.mubr.bf16.gmra.mrb[0].mxu0 %v160
    %v265 = vpop.f32.mrb[0].mxu0
    %v266 = vadd.f32 0.0, %v265
    %v267 = vpop.f32.mrb[0].mxu0
    %v268 = vpop.f32.mrb[0].mxu0
    %v269 = vadd.f32 0.0, %v268
    %v270 = vpop.f32.mrb[0].mxu0
    %271 = vmatprep.mubr.bf16.mxu0 0
    %272 = vmatmul.mubr.bf16.gmra.mrb[0].mxu0 %v161
    %v273 = vpop.f32.mrb[0].mxu0
    %v274 = vadd.f32 0.0, %v273
    %v275 = vpop.f32.mrb[0].mxu0
    %v276 = vpop.f32.mrb[0].mxu0
    %v277 = vadd.f32 0.0, %v276
    %v278 = vpop.f32.mrb[0].mxu0
    %279 = vmatprep.mubr.bf16.mxu0 0
    %280 = vmatmul.mubr.bf16.gmra.mrb[0].mxu0 %v162
    %v281 = vpop.f32.mrb[0].mxu0
    %v282 = vadd.f32 0.0, %v281
    %v283 = vpop.f32.mrb[0].mxu0
    %v284 = vpop.f32.mrb[0].mxu0
    %v285 = vadd.f32 0.0, %v284
    %v286 = vpop.f32.mrb[0].mxu0
    %287 = vmatprep.mubr.bf16.mxu0 0
    %288 = vmatmul.mubr.bf16.gmra.mrb[0].mxu0 %v163
    %v289 = vpop.f32.mrb[0].mxu0
    %v290 = vadd.f32 0.0, %v289
    %v291 = vpop.f32.mrb[0].mxu0
    %v292 = vpop.f32.mrb[0].mxu0
    %v293 = vadd.f32 0.0, %v292
    %v294 = vpop.f32.mrb[0].mxu0
    %295 = vmatprep.mubr.bf16.mxu0 0
    %296 = vmatmul.mubr.bf16.gmra.mrb[0].mxu0 %v164
    %v297 = vpop.f32.mrb[0].mxu0
    %v298 = vadd.f32 0.0, %v297
    %v299 = vpop.f32.mrb[0].mxu0
    %v300 = vpop.f32.mrb[0].mxu0
    %v301 = vadd.f32 0.0, %v300
    %v302 = vpop.f32.mrb[0].mxu0
    %303 = vmatprep.mubr.bf16.mxu0 0
    %304 = vmatmul.mubr.bf16.gmra.mrb[0].mxu0 %v165
    %v305 = vpop.f32.mrb[0].mxu0
    %v306 = vadd.f32 0.0, %v305
    %v307 = vpop.f32.mrb[0].mxu0
    %v308 = vpop.f32.mrb[0].mxu0
    %v309 = vadd.f32 0.0, %v308
    %v310 = vpop.f32.mrb[0].mxu0
    %311 = vmatprep.mubr.bf16.mxu0 0
    %312 = vmatmul.mubr.bf16.gmra.mrb[0].mxu0 %v166
    %v313 = vpop.f32.mrb[0].mxu0
    %v314 = vadd.f32 0.0, %v313
    %v315 = vpop.f32.mrb[0].mxu0
    %v316 = vpop.f32.mrb[0].mxu0
    %v317 = vadd.f32 0.0, %v316
    %v318 = vpop.f32.mrb[0].mxu0
    %319 = vdwg.mxu0
    %v320 = vpack.c.bf16 %v261, %v258
    %v321 = vpack.c.bf16 %v269, %v266
    %v322 = vpack.c.bf16 %v277, %v274
    %v323 = vpack.c.bf16 %v285, %v282
    %v324 = vpack.c.bf16 %v293, %v290
    %v325 = vpack.c.bf16 %v301, %v298
    %v326 = vpack.c.bf16 %v309, %v306
    %v327 = vpack.c.bf16 %v317, %v314
    %v328 = vld [vmem:[%s3] sm:$0x1]
    %v330 = vlaneseq
    %v331 = vshrl.u32 %v330, 7
    %v332 = vsub.s32 0, %v331
    %v333 = vrot.slane %v328, %v332
    %v351 = vunpack.c.l.b16 %v79
    %v352 = vunpack.c.l.b16 %v80
    %v353 = vunpack.c.l.b16 %v81
    %v354 = vunpack.c.l.b16 %v82
    %v355 = vunpack.c.l.b16 %v83
    %v356 = vunpack.c.l.b16 %v84
    %v357 = vunpack.c.l.b16 %v85
    %v358 = vunpack.c.l.b16 %v86
    %v359 = vunpack.c.l.b16 %v87
    %v360 = vunpack.c.l.b16 %v88
    %v361 = vunpack.c.l.b16 %v89
    %v362 = vunpack.c.l.b16 %v90
    %v363 = vunpack.c.l.b16 %v91
    %v364 = vunpack.c.l.b16 %v92
    %v365 = vunpack.c.l.b16 %v93
    %v366 = vunpack.c.l.b16 %v94
    %v367 = vpack.c.b16 %v352, %v351
    %v368 = vpack.c.b16 %v354, %v353
    %v369 = vpack.c.b16 %v356, %v355
    %v370 = vpack.c.b16 %v358, %v357
    %v371 = vpack.c.b16 %v360, %v359
    %v372 = vpack.c.b16 %v362, %v361
    %v373 = vpack.c.b16 %v364, %v363
    %v374 = vpack.c.b16 %v366, %v365
    %383 = vmatprep.subr.bf16.mxu0 0
    %384 = vmatpush1.bf16.msra.mxu0 %v320
    %385 = vmatprep.subr.bf16.mxu0 0
    %386 = vmatpush1.bf16.msra.mxu0 %v321
    %387 = vmatprep.subr.bf16.mxu0 0
    %388 = vmatpush1.bf16.msra.mxu0 %v322
    %389 = vmatprep.subr.bf16.mxu0 0
    %390 = vmatpush1.bf16.msra.mxu0 %v323
    %391 = vmatprep.subr.bf16.mxu0 0
    %392 = vmatpush1.bf16.msra.mxu0 %v324
    %393 = vmatprep.subr.bf16.mxu0 0
    %394 = vmatpush1.bf16.msra.mxu0 %v325
    %395 = vmatprep.subr.bf16.mxu0 0
    %396 = vmatpush1.bf16.msra.mxu0 %v326
    %397 = vmatprep.subr.bf16.mxu0 0
    %398 = vmatpush1.bf16.msra.mxu0 %v327
    %399 = vmatprep.subr.bf16.mxu0 0
    %400 = vmatpush1.bf16.msra.mxu0 0
    %401 = vmatprep.subr.bf16.mxu0 0
    %402 = vmatpush1.bf16.msra.mxu0 0
    %403 = vmatprep.subr.bf16.mxu0 0
    %404 = vmatpush1.bf16.msra.mxu0 0
    %405 = vmatprep.subr.bf16.mxu0 0
    %406 = vmatpush1.bf16.msra.mxu0 0
    %407 = vmatprep.subr.bf16.mxu0 0
    %408 = vmatpush1.bf16.msra.mxu0 0
    %409 = vmatprep.subr.bf16.mxu0 0
    %410 = vmatpush1.bf16.msra.mxu0 0
    %411 = vmatprep.subr.bf16.mxu0 0
    %412 = vmatpush1.bf16.msra.mxu0 0
    %413 = vmatprep.subr.bf16.mxu0 0
    %414 = vmatpush1.bf16.msra.mxu0 0
    %415 = vmatprep.mubr.bf16.mxu0 0
    %416 = vmatmul.mubr.bf16.gmra.mrb[0].mxu0 %v367
    %v417 = vpop.f32.mrb[0].mxu0
    %v418 = vadd.f32 %v333, %v417
    %v419 = vpop.f32.mrb[0].mxu0
    %v420 = vpop.f32.mrb[0].mxu0
    %v421 = vadd.f32 %v333, %v420
    %v422 = vpop.f32.mrb[0].mxu0
    %423 = vmatprep.mubr.bf16.mxu0 0
    %424 = vmatmul.mubr.bf16.gmra.mrb[0].mxu0 %v368
    %v425 = vpop.f32.mrb[0].mxu0
    %v426 = vadd.f32 %v333, %v425
    %v427 = vpop.f32.mrb[0].mxu0
    %v428 = vpop.f32.mrb[0].mxu0
    %v429 = vadd.f32 %v333, %v428
    %v430 = vpop.f32.mrb[0].mxu0
    %431 = vmatprep.mubr.bf16.mxu0 0
    %432 = vmatmul.mubr.bf16.gmra.mrb[0].mxu0 %v369
    %v433 = vpop.f32.mrb[0].mxu0
    %v434 = vadd.f32 %v333, %v433
    %v435 = vpop.f32.mrb[0].mxu0
    %v436 = vpop.f32.mrb[0].mxu0
    %v437 = vadd.f32 %v333, %v436
    %v438 = vpop.f32.mrb[0].mxu0
    %439 = vmatprep.mubr.bf16.mxu0 0
    %440 = vmatmul.mubr.bf16.gmra.mrb[0].mxu0 %v370
    %v441 = vpop.f32.mrb[0].mxu0
    %v442 = vadd.f32 %v333, %v441
    %v443 = vpop.f32.mrb[0].mxu0
    %v444 = vpop.f32.mrb[0].mxu0
    %v445 = vadd.f32 %v333, %v444
    %v446 = vpop.f32.mrb[0].mxu0
    %447 = vmatprep.mubr.bf16.mxu0 0
    %448 = vmatmul.mubr.bf16.gmra.mrb[0].mxu0 %v371
    %v449 = vpop.f32.mrb[0].mxu0
    %v450 = vadd.f32 %v333, %v449
    %v451 = vpop.f32.mrb[0].mxu0
    %v452 = vpop.f32.mrb[0].mxu0
    %v453 = vadd.f32 %v333, %v452
    %v454 = vpop.f32.mrb[0].mxu0
    %455 = vmatprep.mubr.bf16.mxu0 0
    %456 = vmatmul.mubr.bf16.gmra.mrb[0].mxu0 %v372
    %v457 = vpop.f32.mrb[0].mxu0
    %v458 = vadd.f32 %v333, %v457
    %v459 = vpop.f32.mrb[0].mxu0
    %v460 = vpop.f32.mrb[0].mxu0
    %v461 = vadd.f32 %v333, %v460
    %v462 = vpop.f32.mrb[0].mxu0
    %463 = vmatprep.mubr.bf16.mxu0 0
    %464 = vmatmul.mubr.bf16.gmra.mrb[0].mxu0 %v373
    %v465 = vpop.f32.mrb[0].mxu0
    %v466 = vadd.f32 %v333, %v465
    %v467 = vpop.f32.mrb[0].mxu0
    %v468 = vpop.f32.mrb[0].mxu0
    %v469 = vadd.f32 %v333, %v468
    %v470 = vpop.f32.mrb[0].mxu0
    %471 = vmatprep.mubr.bf16.mxu0 0
    %472 = vmatmul.mubr.bf16.gmra.mrb[0].mxu0 %v374
    %v473 = vpop.f32.mrb[0].mxu0
    %v474 = vadd.f32 %v333, %v473
    %v475 = vpop.f32.mrb[0].mxu0
    %v476 = vpop.f32.mrb[0].mxu0
    %v477 = vadd.f32 %v333, %v476
    %v478 = vpop.f32.mrb[0].mxu0
    %479 = vdwg.mxu0
    %v480 = vmax.f32 %v418, 0.0
    %v481 = vmax.f32 %v421, 0.0
    %v482 = vmax.f32 %v426, 0.0
    %v483 = vmax.f32 %v429, 0.0
    %v484 = vmax.f32 %v434, 0.0
    %v485 = vmax.f32 %v437, 0.0
    %v486 = vmax.f32 %v442, 0.0
    %v487 = vmax.f32 %v445, 0.0
    %v488 = vmax.f32 %v450, 0.0
    %v489 = vmax.f32 %v453, 0.0
    %v490 = vmax.f32 %v458, 0.0
    %v491 = vmax.f32 %v461, 0.0
    %v492 = vmax.f32 %v466, 0.0
    %v493 = vmax.f32 %v469, 0.0
    %v494 = vmax.f32 %v474, 0.0
    %v495 = vmax.f32 %v477, 0.0
    %v496 = vpack.c.bf16 %v481, %v480
    %v497 = vpack.c.bf16 %v483, %v482
    %v498 = vpack.c.bf16 %v485, %v484
    %v499 = vpack.c.bf16 %v487, %v486
    %v500 = vpack.c.bf16 %v489, %v488
    %v501 = vpack.c.bf16 %v491, %v490
    %v502 = vpack.c.bf16 %v493, %v492
    %v503 = vpack.c.bf16 %v495, %v494
    %v504 = vld [vmem:[#allocation7] sm:$0xf]
    %v505 = vld [vmem:[#allocation7 + $0x4] sm:$0xf]
    %v506 = vld [vmem:[#allocation7 + $0x8] sm:$0xf]
    %v507 = vld [vmem:[#allocation7 + $0xc] sm:$0xf]
    %v508 = vld [vmem:[#allocation7 + $0x10] sm:$0xf]
    %v509 = vld [vmem:[#allocation7 + $0x14] sm:$0xf]
    %v510 = vld [vmem:[#allocation7 + $0x18] sm:$0xf]
    %v511 = vld [vmem:[#allocation7 + $0x1c] sm:$0xf]
    %v512 = vld [vmem:[#allocation7 + $0x20] sm:$0xf]
    %v513 = vld [vmem:[#allocation7 + $0x24] sm:$0xf]
    %v514 = vld [vmem:[#allocation7 + $0x28] sm:$0xf]
    %v515 = vld [vmem:[#allocation7 + $0x2c] sm:$0xf]
    %v516 = vld [vmem:[#allocation7 + $0x30] sm:$0xf]
    %v517 = vld [vmem:[#allocation7 + $0x34] sm:$0xf]
    %v518 = vld [vmem:[#allocation7 + $0x38] sm:$0xf]
    %v519 = vld [vmem:[#allocation7 + $0x3c] sm:$0xf]
    %v536 = vunpack.c.l.b16 %v504
    %v537 = vunpack.c.l.b16 %v505
    %v538 = vunpack.c.l.b16 %v506
    %v539 = vunpack.c.l.b16 %v507
    %v540 = vunpack.c.l.b16 %v508
    %v541 = vunpack.c.l.b16 %v509
    %v542 = vunpack.c.l.b16 %v510
    %v543 = vunpack.c.l.b16 %v511
    %v544 = vunpack.c.l.b16 %v512
    %v545 = vunpack.c.l.b16 %v513
    %v546 = vunpack.c.l.b16 %v514
    %v547 = vunpack.c.l.b16 %v515
    %v548 = vunpack.c.l.b16 %v516
    %v549 = vunpack.c.l.b16 %v517
    %v550 = vunpack.c.l.b16 %v518
    %v551 = vunpack.c.l.b16 %v519
    %v552 = vpack.c.b16 %v537, %v536
    %v553 = vpack.c.b16 %v539, %v538
    %v554 = vpack.c.b16 %v541, %v540
    %v555 = vpack.c.b16 %v543, %v542
    %v556 = vpack.c.b16 %v545, %v544
    %v557 = vpack.c.b16 %v547, %v546
    %v558 = vpack.c.b16 %v549, %v548
    %v559 = vpack.c.b16 %v551, %v550
    %568 = vmatprep.subr.bf16.mxu0 0
    %569 = vmatpush1.bf16.msra.mxu0 %v552
    %570 = vmatprep.subr.bf16.mxu0 0
    %571 = vmatpush1.bf16.msra.mxu0 %v553
    %572 = vmatprep.subr.bf16.mxu0 0
    %573 = vmatpush1.bf16.msra.mxu0 %v554
    %574 = vmatprep.subr.bf16.mxu0 0
    %575 = vmatpush1.bf16.msra.mxu0 %v555
    %576 = vmatprep.subr.bf16.mxu0 0
    %577 = vmatpush1.bf16.msra.mxu0 %v556
    %578 = vmatprep.subr.bf16.mxu0 0
    %579 = vmatpush1.bf16.msra.mxu0 %v557
    %580 = vmatprep.subr.bf16.mxu0 0
    %581 = vmatpush1.bf16.msra.mxu0 %v558
    %582 = vmatprep.subr.bf16.mxu0 0
    %583 = vmatpush1.bf16.msra.mxu0 %v559
    %584 = vmatprep.subr.bf16.mxu0 0
    %585 = vmatpush1.bf16.msra.mxu0 0
    %586 = vmatprep.subr.bf16.mxu0 0
    %587 = vmatpush1.bf16.msra.mxu0 0
    %588 = vmatprep.subr.bf16.mxu0 0
    %589 = vmatpush1.bf16.msra.mxu0 0
    %590 = vmatprep.subr.bf16.mxu0 0
    %591 = vmatpush1.bf16.msra.mxu0 0
    %592 = vmatprep.subr.bf16.mxu0 0
    %593 = vmatpush1.bf16.msra.mxu0 0
    %594 = vmatprep.subr.bf16.mxu0 0
    %595 = vmatpush1.bf16.msra.mxu0 0
    %596 = vmatprep.subr.bf16.mxu0 0
    %597 = vmatpush1.bf16.msra.mxu0 0
    %598 = vmatprep.subr.bf16.mxu0 0
    %599 = vmatpush1.bf16.msra.mxu0 0
    %600 = vmatprep.mubr.bf16.mxu0 0
    %601 = vmatmul.mubr.bf16.gmra.mrb[0].mxu0 %v496
    %v602 = vpop.f32.mrb[0].mxu0
    %v603 = vadd.f32 0.0, %v602
    %v604 = vpop.f32.mrb[0].mxu0
    %v605 = vpop.f32.mrb[0].mxu0
    %v606 = vadd.f32 0.0, %v605
    %v607 = vpop.f32.mrb[0].mxu0
    %608 = vmatprep.mubr.bf16.mxu0 0
    %609 = vmatmul.mubr.bf16.gmra.mrb[0].mxu0 %v497
    %v610 = vpop.f32.mrb[0].mxu0
    %v611 = vadd.f32 0.0, %v610
    %v612 = vpop.f32.mrb[0].mxu0
    %v613 = vpop.f32.mrb[0].mxu0
    %v614 = vadd.f32 0.0, %v613
    %v615 = vpop.f32.mrb[0].mxu0
    %616 = vmatprep.mubr.bf16.mxu0 0
    %617 = vmatmul.mubr.bf16.gmra.mrb[0].mxu0 %v498
    %v618 = vpop.f32.mrb[0].mxu0
    %v619 = vadd.f32 0.0, %v618
    %v620 = vpop.f32.mrb[0].mxu0
    %v621 = vpop.f32.mrb[0].mxu0
    %v622 = vadd.f32 0.0, %v621
    %v623 = vpop.f32.mrb[0].mxu0
    %624 = vmatprep.mubr.bf16.mxu0 0
    %625 = vmatmul.mubr.bf16.gmra.mrb[0].mxu0 %v499
    %v626 = vpop.f32.mrb[0].mxu0
    %v627 = vadd.f32 0.0, %v626
    %v628 = vpop.f32.mrb[0].mxu0
    %v629 = vpop.f32.mrb[0].mxu0
    %v630 = vadd.f32 0.0, %v629
    %v631 = vpop.f32.mrb[0].mxu0
    %632 = vmatprep.mubr.bf16.mxu0 0
    %633 = vmatmul.mubr.bf16.gmra.mrb[0].mxu0 %v500
    %v634 = vpop.f32.mrb[0].mxu0
    %v635 = vadd.f32 0.0, %v634
    %v636 = vpop.f32.mrb[0].mxu0
    %v637 = vpop.f32.mrb[0].mxu0
    %v638 = vadd.f32 0.0, %v637
    %v639 = vpop.f32.mrb[0].mxu0
    %640 = vmatprep.mubr.bf16.mxu0 0
    %641 = vmatmul.mubr.bf16.gmra.mrb[0].mxu0 %v501
    %v642 = vpop.f32.mrb[0].mxu0
    %v643 = vadd.f32 0.0, %v642
    %v644 = vpop.f32.mrb[0].mxu0
    %v645 = vpop.f32.mrb[0].mxu0
    %v646 = vadd.f32 0.0, %v645
    %v647 = vpop.f32.mrb[0].mxu0
    %648 = vmatprep.mubr.bf16.mxu0 0
    %649 = vmatmul.mubr.bf16.gmra.mrb[0].mxu0 %v502
    %v650 = vpop.f32.mrb[0].mxu0
    %v651 = vadd.f32 0.0, %v650
    %v652 = vpop.f32.mrb[0].mxu0
    %v653 = vpop.f32.mrb[0].mxu0
    %v654 = vadd.f32 0.0, %v653
    %v655 = vpop.f32.mrb[0].mxu0
    %656 = vmatprep.mubr.bf16.mxu0 0
    %657 = vmatmul.mubr.bf16.gmra.mrb[0].mxu0 %v503
    %v658 = vpop.f32.mrb[0].mxu0
    %v659 = vadd.f32 0.0, %v658
    %v660 = vpop.f32.mrb[0].mxu0
    %v661 = vpop.f32.mrb[0].mxu0
    %v662 = vadd.f32 0.0, %v661
    %v663 = vpop.f32.mrb[0].mxu0
    %664 = vdwg.mxu0
    %v665 = vpack.c.bf16 %v606, %v603
    %v666 = vpack.c.bf16 %v614, %v611
    %v667 = vpack.c.bf16 %v622, %v619
    %v668 = vpack.c.bf16 %v630, %v627
    %v669 = vpack.c.bf16 %v638, %v635
    %v670 = vpack.c.bf16 %v646, %v643
    %v671 = vpack.c.bf16 %v654, %v651
    %v672 = vpack.c.bf16 %v662, %v659
    %v673 = vld [vmem:[%s5] sm:$0x1]
    %v675 = vlaneseq
    %v676 = vshrl.u32 %v675, 7
    %v677 = vsub.s32 0, %v676
    %v678 = vrot.slane %v673, %v677
    %680 = vmatprep.subr.bf16.mxu0 0
    %681 = vmatpush1.bf16.msra.mxu0 %v665
    %682 = vmatprep.subr.bf16.mxu0 0
    %683 = vmatpush1.bf16.msra.mxu0 %v666
    %684 = vmatprep.subr.bf16.mxu0 0
    %685 = vmatpush1.bf16.msra.mxu0 %v667
    %686 = vmatprep.subr.bf16.mxu0 0
    %687 = vmatpush1.bf16.msra.mxu0 %v668
    %688 = vmatprep.subr.bf16.mxu0 0
    %689 = vmatpush1.bf16.msra.mxu0 %v669
    %690 = vmatprep.subr.bf16.mxu0 0
    %691 = vmatpush1.bf16.msra.mxu0 %v670
    %692 = vmatprep.subr.bf16.mxu0 0
    %693 = vmatpush1.bf16.msra.mxu0 %v671
    %694 = vmatprep.subr.bf16.mxu0 0
    %695 = vmatpush1.bf16.msra.mxu0 %v672
    %696 = vmatprep.subr.bf16.mxu0 0
    %697 = vmatpush1.bf16.msra.mxu0 0
    %698 = vmatprep.subr.bf16.mxu0 0
    %699 = vmatpush1.bf16.msra.mxu0 0
    %700 = vmatprep.subr.bf16.mxu0 0
    %701 = vmatpush1.bf16.msra.mxu0 0
    %702 = vmatprep.subr.bf16.mxu0 0
    %703 = vmatpush1.bf16.msra.mxu0 0
    %704 = vmatprep.subr.bf16.mxu0 0
    %705 = vmatpush1.bf16.msra.mxu0 0
    %706 = vmatprep.subr.bf16.mxu0 0
    %707 = vmatpush1.bf16.msra.mxu0 0
    %708 = vmatprep.subr.bf16.mxu0 0
    %709 = vmatpush1.bf16.msra.mxu0 0
    %710 = vmatprep.subr.bf16.mxu0 0
    %711 = vmatpush1.bf16.msra.mxu0 0
    %712 = vmatprep.mubr.bf16.mxu0 0
    %713 = vmatmul.mubr.bf16.gmra.mrb[0].mxu0 %v367
    %v714 = vpop.f32.mrb[0].mxu0
    %v715 = vadd.f32 %v678, %v714
    %v716 = vpop.f32.mrb[0].mxu0
    %v717 = vpop.f32.mrb[0].mxu0
    %v718 = vadd.f32 %v678, %v717
    %v719 = vpop.f32.mrb[0].mxu0
    %720 = vmatprep.mubr.bf16.mxu0 0
    %721 = vmatmul.mubr.bf16.gmra.mrb[0].mxu0 %v368
    %v722 = vpop.f32.mrb[0].mxu0
    %v723 = vadd.f32 %v678, %v722
    %v724 = vpop.f32.mrb[0].mxu0
    %v725 = vpop.f32.mrb[0].mxu0
    %v726 = vadd.f32 %v678, %v725
    %v727 = vpop.f32.mrb[0].mxu0
    %728 = vmatprep.mubr.bf16.mxu0 0
    %729 = vmatmul.mubr.bf16.gmra.mrb[0].mxu0 %v369
    %v730 = vpop.f32.mrb[0].mxu0
    %v731 = vadd.f32 %v678, %v730
    %v732 = vpop.f32.mrb[0].mxu0
    %v733 = vpop.f32.mrb[0].mxu0
    %v734 = vadd.f32 %v678, %v733
    %v735 = vpop.f32.mrb[0].mxu0
    %736 = vmatprep.mubr.bf16.mxu0 0
    %737 = vmatmul.mubr.bf16.gmra.mrb[0].mxu0 %v370
    %v738 = vpop.f32.mrb[0].mxu0
    %v739 = vadd.f32 %v678, %v738
    %v740 = vpop.f32.mrb[0].mxu0
    %v741 = vpop.f32.mrb[0].mxu0
    %v742 = vadd.f32 %v678, %v741
    %v743 = vpop.f32.mrb[0].mxu0
    %744 = vmatprep.mubr.bf16.mxu0 0
    %745 = vmatmul.mubr.bf16.gmra.mrb[0].mxu0 %v371
    %v746 = vpop.f32.mrb[0].mxu0
    %v747 = vadd.f32 %v678, %v746
    %v748 = vpop.f32.mrb[0].mxu0
    %v749 = vpop.f32.mrb[0].mxu0
    %v750 = vadd.f32 %v678, %v749
    %v751 = vpop.f32.mrb[0].mxu0
    %752 = vmatprep.mubr.bf16.mxu0 0
    %753 = vmatmul.mubr.bf16.gmra.mrb[0].mxu0 %v372
    %v754 = vpop.f32.mrb[0].mxu0
    %v755 = vadd.f32 %v678, %v754
    %v756 = vpop.f32.mrb[0].mxu0
    %v757 = vpop.f32.mrb[0].mxu0
    %v758 = vadd.f32 %v678, %v757
    %v759 = vpop.f32.mrb[0].mxu0
    %760 = vmatprep.mubr.bf16.mxu0 0
    %761 = vmatmul.mubr.bf16.gmra.mrb[0].mxu0 %v373
    %v762 = vpop.f32.mrb[0].mxu0
    %v763 = vadd.f32 %v678, %v762
    %v764 = vpop.f32.mrb[0].mxu0
    %v765 = vpop.f32.mrb[0].mxu0
    %v766 = vadd.f32 %v678, %v765
    %v767 = vpop.f32.mrb[0].mxu0
    %768 = vmatprep.mubr.bf16.mxu0 0
    %769 = vmatmul.mubr.bf16.gmra.mrb[0].mxu0 %v374
    %v770 = vpop.f32.mrb[0].mxu0
    %v771 = vadd.f32 %v678, %v770
    %v772 = vpop.f32.mrb[0].mxu0
    %v773 = vpop.f32.mrb[0].mxu0
    %v774 = vadd.f32 %v678, %v773
    %v775 = vpop.f32.mrb[0].mxu0
    %776 = vdwg.mxu0
    %777 = vst [vmem:[%s6] sm:$0xff] %v715
    %778 = vst [vmem:[%s6 + $0x8] sm:$0xff] %v718
    %779 = vst [vmem:[%s6 + $0x10] sm:$0xff] %v723
    %780 = vst [vmem:[%s6 + $0x18] sm:$0xff] %v726
    %781 = vst [vmem:[%s6 + $0x20] sm:$0xff] %v731
    %782 = vst [vmem:[%s6 + $0x28] sm:$0xff] %v734
    %783 = vst [vmem:[%s6 + $0x30] sm:$0xff] %v739
    %784 = vst [vmem:[%s6 + $0x38] sm:$0xff] %v742
    %785 = vst [vmem:[%s6 + $0x40] sm:$0xff] %v747
    %786 = vst [vmem:[%s6 + $0x48] sm:$0xff] %v750
    %787 = vst [vmem:[%s6 + $0x50] sm:$0xff] %v755
    %788 = vst [vmem:[%s6 + $0x58] sm:$0xff] %v758
    %789 = vst [vmem:[%s6 + $0x60] sm:$0xff] %v763
    %790 = vst [vmem:[%s6 + $0x68] sm:$0xff] %v766
    %791 = vst [vmem:[%s6 + $0x70] sm:$0xff] %v771
    %792 = vst [vmem:[%s6 + $0x78] sm:$0xff] %v774
    // Predicated region
    $region42: #{simple_gcn_forward.1} parent=1 // pred_check
      _
    $region43: #{simple_gcn_forward.1} parent=1 // pred_check_branch
      %794 = sbr.rel (0) target = $region45
    $region44: #{simple_gcn_forward.1} parent=1 // pred_region
      _
    $region45: #{simple_gcn_forward.1} parent=1 // pred_fallthru
      _
    // Predicated region
    $region46: #{simple_gcn_forward.1} parent=1 // pred_check
      _
    $region47: #{simple_gcn_forward.1} parent=1 // pred_check_branch
      %796 = sbr.rel (0) target = $region49
    $region48: #{simple_gcn_forward.1} parent=1 // pred_region
      _
    $region49: #{simple_gcn_forward.1} parent=1 // pred_fallthru
      _
    %797 = vsyncpa [#allocation3], 1
    %798 = vsyncpa [#allocation5], 1
    %799 = vsyncpa [#allocation8], 1

</llo_original>
